<compile_context>
chip_gen: v6e
topology: v6e:2x2x1
jax: 0.10.0
libtpu: 0.0.40
codegen_flags: <defaults>
</compile_context>

<pallas_src>
import jax
import jax.numpy as jnp
from jax import lax
from jax.experimental import pallas as pl
from jax.experimental.pallas import tpu as pltpu


_LANE = 128
_SUBLANE = 8
_MIN_TILE_N = 512
_MAX_TILE_N = 8192
_WEIGHT_TILE_BYTES_TARGET = 1 << 20   # ~1 MiB of streamed weight per grid step


def _round_up(x, m):
    return (x + m - 1) // m * m


def _choose_vocab_tiling(vocab, din, tile_n=None):
    """Pick (tile_n, vocab_pad): wide lane-dense tiles, even tile count."""
    v128 = _round_up(vocab, _LANE)
    if tile_n is None:
        tile_n = _WEIGHT_TILE_BYTES_TARGET // max(2 * din, 1)   # bf16 bytes
        tile_n = max(min(tile_n, _MAX_TILE_N), _MIN_TILE_N)
    tile_n = _round_up(min(tile_n, v128), _LANE)
    n_tiles = -(-v128 // tile_n)
    if n_tiles > 1 and n_tiles % 2 == 1:
        n_tiles += 1          # even tile count -> balanced v7x megacore split
    tile_n = _round_up(-(-v128 // n_tiles), _LANE)
    return tile_n, tile_n * n_tiles


# ---------------------------------------------------------------------------
# Kernel: tiled GEMM  logits[:, j*TN:(j+1)*TN] = x @ W[:, j*TN:(j+1)*TN] + b
# ---------------------------------------------------------------------------
def _logits_kernel(x_ref, w_ref, b_ref, o_ref):
    # x: (Bp, DIN) bf16 (resident), w: (DIN, TN) bf16 tile (streamed),
    # b: (1, TN) f32, o: (Bp, TN) f32 (lane- and sublane-dense full stores).
    o_ref[...] = jnp.dot(x_ref[...], w_ref[...],
                         preferred_element_type=jnp.float32) + b_ref[...]


def prepare_cbow0_params(embedding_table, linear_w, linear_b, *,
                         tile_n=None, weight_dtype=jnp.bfloat16):
    """One-time parameter prep (keeps the per-call hot path transpose-free).

    linear_w: (V, DIN) PyTorch Linear layout -> stored as (DIN, Vpad) weight_dtype
    linear_b: (V,)                            -> stored as (1, Vpad) f32 (zero pad)
    """
    vocab, din = linear_w.shape
    tn, vpad = _choose_vocab_tiling(vocab, din, tile_n)

    w_t = jnp.asarray(linear_w, jnp.float32).T.astype(weight_dtype)   # (DIN, V)
    w_t = jnp.pad(w_t, ((0, 0), (0, vpad - vocab)))
    b = jnp.pad(jnp.asarray(linear_b, jnp.float32).reshape(1, vocab),
                ((0, 0), (0, vpad - vocab)))

    return dict(
        embedding=jnp.asarray(embedding_table, jnp.float32),
        w_t=w_t, b=b, vocab=vocab, vpad=vpad, tile_n=tn, din=din,
    )


def _compute_logits_padded(x_pad, params):
    """x_pad: (Bp, DIN) weight-dtype, Bp multiple of 8 -> (Bp, Vpad) f32."""
    w_t, b = params["w_t"], params["b"]
    din, vpad, tn = params["din"], params["vpad"], params["tile_n"]
    bp = x_pad.shape[0]
    n_tiles = vpad // tn
    wbytes = jnp.dtype(w_t.dtype).itemsize

    cost = pl.CostEstimate(
        flops=2 * bp * din * vpad,
        transcendentals=0,
        bytes_accessed=din * vpad * wbytes        # weight stream (dominant)
        + bp * din * wbytes                       # x
        + vpad * 4 + bp * vpad * 4,               # bias + logits out
    )

    # Deeper buffering on the one large streamed operand only (hides DMA issue
    # latency behind tiny per-tile compute); bias/x/out stay at the default 2.
    w_spec_kwargs = {}
    if n_tiles >= 3:
        w_spec_kwargs["pipeline_mode"] = pl.Buffered(3)

    return pl.pallas_call(
        _logits_kernel,
        out_shape=jax.ShapeDtypeStruct((bp, vpad), jnp.float32),
        grid=(n_tiles,),
        in_specs=[
            pl.BlockSpec((bp, din), lambda j: (0, 0)),      # x: resident
            pl.BlockSpec((din, tn), lambda j: (0, j),       # weight: streamed
                         **w_spec_kwargs),
            pl.BlockSpec((1, tn), lambda j: (0, j)),        # bias tile
        ],
        out_specs=pl.BlockSpec((bp, tn), lambda j: (0, j)), # lane-dense output
        compiler_params=pltpu.CompilerParams(
            dimension_semantics=("parallel",),              # megacore-shardable
            vmem_limit_bytes=32 * 1024 * 1024,              # safe v5e/v6e/v7x
        ),
        cost_estimate=cost,
    )(x_pad, w_t, b)


def cbow0_forward_batched(inputs, params):
    """inputs: (B, 2*context) int32 token ids -> (B, vocab) f32 log-probs."""
    emb, din, vocab = params["embedding"], params["din"], params["vocab"]
    b_rows = inputs.shape[0]
    bp = _round_up(max(b_rows, _SUBLANE), _SUBLANE)

    # Layout glue: embedding gather + flatten (PyTorch .view((1, -1))), padded
    # to a sublane-dense row count.
    x = jnp.take(emb, inputs, axis=0).reshape(b_rows, din)
    x = x.astype(params["w_t"].dtype)
    x = jnp.pad(x, ((0, bp - b_rows), (0, 0)))

    logits = _compute_logits_padded(x, params)

    # Log-softmax epilogue in plain XLA on the sliced rows: no second kernel
    # launch, no padded-logits HBM round trip, keeps the 'parallel' vocab grid.
    return jax.nn.log_softmax(logits[:b_rows, :vocab], axis=-1)


def cbow0_forward(inputs, params):
    """inputs: (2*context,) int32 token ids -> (1, vocab) f32 log-probs."""
    return cbow0_forward_batched(inputs.reshape(1, -1), params)


if __name__ == "__main__":
    # Small deterministic synthetic config (vocab not a multiple of 128, so the
    # padding path is exercised).
    VOCAB = 2000
    EMB_DIM = 32
    CONTEXT = 2
    DIN = 2 * CONTEXT * EMB_DIM   # 128

    key = jax.random.PRNGKey(0)
    k_emb, k_w, k_b, k_idx = jax.random.split(key, 4)

    embedding_table = jax.random.normal(k_emb, (VOCAB, EMB_DIM), dtype=jnp.float32)
    linear_w = jax.random.normal(k_w, (VOCAB, DIN), dtype=jnp.float32) * 0.05
    linear_b = jax.random.normal(k_b, (VOCAB,), dtype=jnp.float32) * 0.05
    inputs = jax.random.randint(k_idx, (2 * CONTEXT,), 0, VOCAB, dtype=jnp.int32)

    params = prepare_cbow0_params(embedding_table, linear_w, linear_b)

    # --- single-context forward (exact PyTorch module semantics) ------------
    log_probs = jax.block_until_ready(cbow0_forward(inputs, params))

    # Reference on the same bf16-rounded operands (f32 accumulation).
    x_bf = jnp.take(embedding_table, inputs, axis=0).reshape(1, DIN)
    x_bf = x_bf.astype(jnp.bfloat16).astype(jnp.float32)
    w_bf = linear_w.astype(jnp.bfloat16).astype(jnp.float32)
    ref = jax.nn.log_softmax(
        jnp.dot(x_bf, w_bf.T, precision=lax.Precision.HIGHEST)
        + linear_b[None, :], axis=-1)

    assert log_probs.shape == (1, VOCAB)
    assert bool(jnp.all(jnp.isfinite(log_probs)))
    assert jnp.allclose(log_probs, ref, atol=2e-3, rtol=2e-3), (
        float(jnp.max(jnp.abs(log_probs - ref))))

    # --- batched path (amortizes the weight stream across contexts) ---------
    B = 5
    binputs = jax.random.randint(jax.random.PRNGKey(1), (B, 2 * CONTEXT),
                                 0, VOCAB, dtype=jnp.int32)
    blog = jax.block_until_ready(cbow0_forward_batched(binputs, params))

    xb = jnp.take(embedding_table, binputs, axis=0).reshape(B, DIN)
    xb = xb.astype(jnp.bfloat16).astype(jnp.float32)
    bref = jax.nn.log_softmax(
        jnp.dot(xb, w_bf.T, precision=lax.Precision.HIGHEST)
        + linear_b[None, :], axis=-1)

    assert blog.shape == (B, VOCAB)
    assert bool(jnp.all(jnp.isfinite(blog)))
    assert jnp.allclose(blog, bref, atol=2e-3, rtol=2e-3), (
        float(jnp.max(jnp.abs(blog - bref))))

    print("KERNEL_OK")
</pallas_src>

<mosaic_0001>
module attributes {stable_mosaic.version = 11 : i64} {
  func.func @_logits_kernel(%arg0: i32, %arg1: memref<8x128xbf16, #tpu.memory_space<vmem>>, %arg2: memref<128x2048xbf16, #tpu.memory_space<vmem>>, %arg3: memref<1x2048xf32, #tpu.memory_space<vmem>>, %arg4: memref<8x2048xf32, #tpu.memory_space<vmem>>) attributes {dimension_semantics = [#tpu.dimension_semantics<parallel>], iteration_bounds = array<i64: 1>, scalar_prefetch = 0 : i64, scratch_operands = 0 : i64, tpu.core_type = #tpu.core_type<tc>, window_params = [{pipeline_mode = #tpu.pipeline_mode<synchronous>, transform_indices = @transform_0, window_bounds = array<i64: 8, 128>}, {transform_indices = @transform_1, window_bounds = array<i64: 128, 2048>}, {transform_indices = @transform_2, window_bounds = array<i64: 1, 2048>}, {transform_indices = @transform_3, window_bounds = array<i64: 8, 2048>}]} {
    %c0 = arith.constant 0 : index
    %c0_0 = arith.constant 0 : index
    %0 = vector.load %arg1[%c0, %c0_0] : memref<8x128xbf16, #tpu.memory_space<vmem>>, vector<8x128xbf16>
    %c0_1 = arith.constant 0 : index
    %c0_2 = arith.constant 0 : index
    %1 = vector.load %arg2[%c0_1, %c0_2] : memref<128x2048xbf16, #tpu.memory_space<vmem>>, vector<128x2048xbf16>
    %cst = arith.constant dense<0.000000e+00> : vector<8x2048xf32>
    %2 = tpu.matmul %0, %1, %cst {dimension_numbers = #tpu.dot_dimension_numbers<[1], [0], [0], [1], [0, 0, 1, 1], [], []>} : vector<8x128xbf16>, vector<128x2048xbf16>, vector<8x2048xf32> -> vector<8x2048xf32>
    %c0_3 = arith.constant 0 : index
    %c0_4 = arith.constant 0 : index
    %3 = vector.load %arg3[%c0_3, %c0_4] : memref<1x2048xf32, #tpu.memory_space<vmem>>, vector<1x2048xf32>
    %4 = vector.broadcast %3 : vector<1x2048xf32> to vector<8x2048xf32>
    %5 = arith.addf %2, %4 : vector<8x2048xf32>
    %c0_5 = arith.constant 0 : index
    %c0_6 = arith.constant 0 : index
    %6 = vector.load %arg4[%c0_5, %c0_6] : memref<8x2048xf32, #tpu.memory_space<vmem>>, vector<8x2048xf32>
    tpu.vector_store %arg4[%c0_5, %c0_6], %5 {strides = array<i32>} : memref<8x2048xf32, #tpu.memory_space<vmem>>, vector<8x2048xf32>,
    return
  }
  func.func @transform_0(%arg0: i32) -> (i32, i32) {
    %c0_i32 = arith.constant 0 : i32
    %c0_i32_0 = arith.constant 0 : i32
    %c0_i32_1 = arith.constant 0 : i32
    return %c0_i32, %c0_i32_0 : i32, i32
  }
  func.func @transform_1(%arg0: i32) -> (i32, i32) {
    %c0_i32 = arith.constant 0 : i32
    %c0_i32_0 = arith.constant 0 : i32
    return %c0_i32, %arg0 : i32, i32
  }
  func.func @transform_2(%arg0: i32) -> (i32, i32) {
    %c0_i32 = arith.constant 0 : i32
    %c0_i32_0 = arith.constant 0 : i32
    return %c0_i32, %arg0 : i32, i32
  }
  func.func @transform_3(%arg0: i32) -> (i32, i32) {
    %c0_i32 = arith.constant 0 : i32
    %c0_i32_0 = arith.constant 0 : i32
    return %c0_i32, %arg0 : i32, i32
  }
}

</mosaic_0001>

<llo_original>
// kernel: tpu_custom_call.1
$region0: #{tpu_custom_call.1}
  #allocation0 [shape = 'u32[]', space=smem, size = 0x4, offset = 0x4, fixed_abs, tag = 'smem constant byte address 0x4 - core index']
  #allocation1 [shape = 'u32[144,128]{1,0:T(1,128)}', space=vmem, size = 0x12000, scoped, tag = 'internal scratch']
  %s0 = inlined_call_operand.hbm [shape: bf16[8,128], index: 0, kind: input, shape index: {}]
  %s1 = inlined_call_operand.hbm [shape: bf16[128,2048], index: 1, kind: input, shape index: {}]
  %s2 = inlined_call_operand.hbm [shape: f32[1,2048], index: 2, kind: input, shape index: {}]
  %s3 = inlined_call_operand.hbm [shape: f32[8,2048], index: 3, kind: output, shape index: {}]
  %s4 = sld [smem:[#allocation0]]
  $region34: #{tpu_custom_call.1} parent=0
    _
  %s6 = ssub.s32 1, %s4
  %s7 = scalar_select 0, %s6, %s4
  $region1: #{tpu_custom_call.1} parent=0
    #allocation2 [shape = 'u8[2048]{0}', space=vmem, size = 0x800, scoped, tag = 'input window, operand 0, single buffered']
    #allocation3 [shape = 's32[1]{0}', space=sflag, size = 0x4, scoped, tag = 'scoped memory for tpu_custom_call.1']
    #allocation4 [shape = 's32[1]{0}', space=sflag, size = 0x4, scoped, tag = 'scoped memory for tpu_custom_call.1']
    #allocation5 [shape = 'u8[524288]{0}', space=vmem, size = 0x80000, scoped, tag = 'input window, operand 1, single buffered']
    #allocation6 [shape = 's32[1]{0}', space=sflag, size = 0x4, scoped, tag = 'scoped memory for tpu_custom_call.1']
    #allocation7 [shape = 'u8[8192]{0}', space=vmem, size = 0x2000, scoped, tag = 'input window, operand 2, single buffered']
    #allocation8 [shape = 'u8[65536]{0}', space=vmem, size = 0x10000, scoped, tag = 'output window, operand 0, single buffered']
    %8 = vsyncpa [#allocation3], 0
    %9 = vsyncpa [#allocation6], 0
    %10 = vsyncpa [#allocation4], 0
    // Predicated region
    $region2: #{tpu_custom_call.1} parent=1 // pred_check
      _
    $region3: #{tpu_custom_call.1} parent=1 // pred_check_branch
      %12 = sbr.rel (0) target = $region5
    $region4: #{tpu_custom_call.1} parent=1 // pred_region
      %s14 = ssub.s32 64, 64
      %15 = vsyncadd [#allocation3], %s14
      %s17 = sshll.u32 [#allocation2], 4
      %s18 = int_to_ptr.vmem [resolvable:$true] %s17
      %20 = dma.hbm_to_vmem [thread:$0]  %s0, 64, %s18, [#allocation3]
    $region5: #{tpu_custom_call.1} parent=1 // pred_fallthru
      _
    // Predicated region
    $region6: #{tpu_custom_call.1} parent=1 // pred_check
      _
    $region7: #{tpu_custom_call.1} parent=1 // pred_check_branch
      %22 = sbr.rel (0) target = $region9
    $region8: #{tpu_custom_call.1} parent=1 // pred_region
      %s24 = ssub.s32 16384, 16384
      %25 = vsyncadd [#allocation6], %s24
      %s26 = sshll.u32 [#allocation5], 4
      %s27 = int_to_ptr.vmem [resolvable:$true] %s26
      %32 = dma.hbm_to_vmem [thread:$0]  %s1, 16384, %s27, [#allocation6], 1024, 1024, 64
    $region9: #{tpu_custom_call.1} parent=1 // pred_fallthru
      _
    // Predicated region
    $region10: #{tpu_custom_call.1} parent=1 // pred_check
      _
    $region11: #{tpu_custom_call.1} parent=1 // pred_check_branch
      %34 = sbr.rel (0) target = $region13
    $region12: #{tpu_custom_call.1} parent=1 // pred_region
      %s36 = ssub.s32 256, 256
      %37 = vsyncadd [#allocation6], %s36
      %s39 = sshll.u32 [#allocation7], 4
      %s40 = int_to_ptr.vmem [resolvable:$true] %s39
      %42 = dma.hbm_to_vmem [thread:$0]  %s2, 256, %s40, [#allocation6]
    $region13: #{tpu_custom_call.1} parent=1 // pred_fallthru
      _
    // Predicated region
    $region14: #{tpu_custom_call.1} parent=1 // pred_check
      _
    $region15: #{tpu_custom_call.1} parent=1 // pred_check_branch
      %44 = sbr.rel (0) target = $region17
    $region16: #{tpu_custom_call.1} parent=1 // pred_region
      %45 = dma.done [#allocation3], 64
    $region17: #{tpu_custom_call.1} parent=1 // pred_fallthru
      _
    // Predicated region
    $region18: #{tpu_custom_call.1} parent=1 // pred_check
      _
    $region19: #{tpu_custom_call.1} parent=1 // pred_check_branch
      %47 = sbr.rel (0) target = $region21
    $region20: #{tpu_custom_call.1} parent=1 // pred_region
      %48 = dma.done [#allocation6], 16384
    $region21: #{tpu_custom_call.1} parent=1 // pred_fallthru
      _
    // Predicated region
    $region22: #{tpu_custom_call.1} parent=1 // pred_check
      _
    $region23: #{tpu_custom_call.1} parent=1 // pred_check_branch
      %50 = sbr.rel (0) target = $region25
    $region24: #{tpu_custom_call.1} parent=1 // pred_region
      %51 = dma.done [#allocation6], 256
    $region25: #{tpu_custom_call.1} parent=1 // pred_fallthru
      _
    %v53 = vld [vmem:[#allocation2] sm:$0xf]
    %v54 = vld [vmem:[#allocation5] sm:$0xff]
    %v55 = vld [vmem:[#allocation5 + $0x8] sm:$0xff]
    %v56 = vld [vmem:[#allocation5 + $0x10] sm:$0xff]
    %v57 = vld [vmem:[#allocation5 + $0x18] sm:$0xff]
    %v58 = vld [vmem:[#allocation5 + $0x20] sm:$0xff]
    %v59 = vld [vmem:[#allocation5 + $0x28] sm:$0xff]
    %v60 = vld [vmem:[#allocation5 + $0x30] sm:$0xff]
    %v61 = vld [vmem:[#allocation5 + $0x38] sm:$0xff]
    %v62 = vld [vmem:[#allocation5 + $0x40] sm:$0xff]
    %v63 = vld [vmem:[#allocation5 + $0x48] sm:$0xff]
    %v64 = vld [vmem:[#allocation5 + $0x50] sm:$0xff]
    %v65 = vld [vmem:[#allocation5 + $0x58] sm:$0xff]
    %v66 = vld [vmem:[#allocation5 + $0x60] sm:$0xff]
    %v67 = vld [vmem:[#allocation5 + $0x68] sm:$0xff]
    %v68 = vld [vmem:[#allocation5 + $0x70] sm:$0xff]
    %v69 = vld [vmem:[#allocation5 + $0x78] sm:$0xff]
    %v70 = vld [vmem:[#allocation5 + $0x80] sm:$0xff]
    %v71 = vld [vmem:[#allocation5 + $0x88] sm:$0xff]
    %v72 = vld [vmem:[#allocation5 + $0x90] sm:$0xff]
    %v73 = vld [vmem:[#allocation5 + $0x98] sm:$0xff]
    %v74 = vld [vmem:[#allocation5 + $0xa0] sm:$0xff]
    %v75 = vld [vmem:[#allocation5 + $0xa8] sm:$0xff]
    %v76 = vld [vmem:[#allocation5 + $0xb0] sm:$0xff]
    %v77 = vld [vmem:[#allocation5 + $0xb8] sm:$0xff]
    %v78 = vld [vmem:[#allocation5 + $0xc0] sm:$0xff]
    %v79 = vld [vmem:[#allocation5 + $0xc8] sm:$0xff]
    %v80 = vld [vmem:[#allocation5 + $0xd0] sm:$0xff]
    %v81 = vld [vmem:[#allocation5 + $0xd8] sm:$0xff]
    %v82 = vld [vmem:[#allocation5 + $0xe0] sm:$0xff]
    %v83 = vld [vmem:[#allocation5 + $0xe8] sm:$0xff]
    %v84 = vld [vmem:[#allocation5 + $0xf0] sm:$0xff]
    %v85 = vld [vmem:[#allocation5 + $0xf8] sm:$0xff]
    %v86 = vld [vmem:[#allocation5 + $0x100] sm:$0xff]
    %v87 = vld [vmem:[#allocation5 + $0x108] sm:$0xff]
    %v88 = vld [vmem:[#allocation5 + $0x110] sm:$0xff]
    %v89 = vld [vmem:[#allocation5 + $0x118] sm:$0xff]
    %v90 = vld [vmem:[#allocation5 + $0x120] sm:$0xff]
    %v91 = vld [vmem:[#allocation5 + $0x128] sm:$0xff]
    %v92 = vld [vmem:[#allocation5 + $0x130] sm:$0xff]
    %v93 = vld [vmem:[#allocation5 + $0x138] sm:$0xff]
    %v94 = vld [vmem:[#allocation5 + $0x140] sm:$0xff]
    %v95 = vld [vmem:[#allocation5 + $0x148] sm:$0xff]
    %v96 = vld [vmem:[#allocation5 + $0x150] sm:$0xff]
    %v97 = vld [vmem:[#allocation5 + $0x158] sm:$0xff]
    %v98 = vld [vmem:[#allocation5 + $0x160] sm:$0xff]
    %v99 = vld [vmem:[#allocation5 + $0x168] sm:$0xff]
    %v100 = vld [vmem:[#allocation5 + $0x170] sm:$0xff]
    %v101 = vld [vmem:[#allocation5 + $0x178] sm:$0xff]
    %v102 = vld [vmem:[#allocation5 + $0x180] sm:$0xff]
    %v103 = vld [vmem:[#allocation5 + $0x188] sm:$0xff]
    %v104 = vld [vmem:[#allocation5 + $0x190] sm:$0xff]
    %v105 = vld [vmem:[#allocation5 + $0x198] sm:$0xff]
    %v106 = vld [vmem:[#allocation5 + $0x1a0] sm:$0xff]
    %v107 = vld [vmem:[#allocation5 + $0x1a8] sm:$0xff]
    %v108 = vld [vmem:[#allocation5 + $0x1b0] sm:$0xff]
    %v109 = vld [vmem:[#allocation5 + $0x1b8] sm:$0xff]
    %v110 = vld [vmem:[#allocation5 + $0x1c0] sm:$0xff]
    %v111 = vld [vmem:[#allocation5 + $0x1c8] sm:$0xff]
    %v112 = vld [vmem:[#allocation5 + $0x1d0] sm:$0xff]
    %v113 = vld [vmem:[#allocation5 + $0x1d8] sm:$0xff]
    %v114 = vld [vmem:[#allocation5 + $0x1e0] sm:$0xff]
    %v115 = vld [vmem:[#allocation5 + $0x1e8] sm:$0xff]
    %v116 = vld [vmem:[#allocation5 + $0x1f0] sm:$0xff]
    %v117 = vld [vmem:[#allocation5 + $0x1f8] sm:$0xff]
    %v118 = vld [vmem:[#allocation5 + $0x200] sm:$0xff]
    %v119 = vld [vmem:[#allocation5 + $0x208] sm:$0xff]
    %v120 = vld [vmem:[#allocation5 + $0x210] sm:$0xff]
    %v121 = vld [vmem:[#allocation5 + $0x218] sm:$0xff]
    %v122 = vld [vmem:[#allocation5 + $0x220] sm:$0xff]
    %v123 = vld [vmem:[#allocation5 + $0x228] sm:$0xff]
    %v124 = vld [vmem:[#allocation5 + $0x230] sm:$0xff]
    %v125 = vld [vmem:[#allocation5 + $0x238] sm:$0xff]
    %v126 = vld [vmem:[#allocation5 + $0x240] sm:$0xff]
    %v127 = vld [vmem:[#allocation5 + $0x248] sm:$0xff]
    %v128 = vld [vmem:[#allocation5 + $0x250] sm:$0xff]
    %v129 = vld [vmem:[#allocation5 + $0x258] sm:$0xff]
    %v130 = vld [vmem:[#allocation5 + $0x260] sm:$0xff]
    %v131 = vld [vmem:[#allocation5 + $0x268] sm:$0xff]
    %v132 = vld [vmem:[#allocation5 + $0x270] sm:$0xff]
    %v133 = vld [vmem:[#allocation5 + $0x278] sm:$0xff]
    %v134 = vld [vmem:[#allocation5 + $0x280] sm:$0xff]
    %v135 = vld [vmem:[#allocation5 + $0x288] sm:$0xff]
    %v136 = vld [vmem:[#allocation5 + $0x290] sm:$0xff]
    %v137 = vld [vmem:[#allocation5 + $0x298] sm:$0xff]
    %v138 = vld [vmem:[#allocation5 + $0x2a0] sm:$0xff]
    %v139 = vld [vmem:[#allocation5 + $0x2a8] sm:$0xff]
    %v140 = vld [vmem:[#allocation5 + $0x2b0] sm:$0xff]
    %v141 = vld [vmem:[#allocation5 + $0x2b8] sm:$0xff]
    %v142 = vld [vmem:[#allocation5 + $0x2c0] sm:$0xff]
    %v143 = vld [vmem:[#allocation5 + $0x2c8] sm:$0xff]
    %v144 = vld [vmem:[#allocation5 + $0x2d0] sm:$0xff]
    %v145 = vld [vmem:[#allocation5 + $0x2d8] sm:$0xff]
    %v146 = vld [vmem:[#allocation5 + $0x2e0] sm:$0xff]
    %v147 = vld [vmem:[#allocation5 + $0x2e8] sm:$0xff]
    %v148 = vld [vmem:[#allocation5 + $0x2f0] sm:$0xff]
    %v149 = vld [vmem:[#allocation5 + $0x2f8] sm:$0xff]
    %v150 = vld [vmem:[#allocation5 + $0x300] sm:$0xff]
    %v151 = vld [vmem:[#allocation5 + $0x308] sm:$0xff]
    %v152 = vld [vmem:[#allocation5 + $0x310] sm:$0xff]
    %v153 = vld [vmem:[#allocation5 + $0x318] sm:$0xff]
    %v154 = vld [vmem:[#allocation5 + $0x320] sm:$0xff]
    %v155 = vld [vmem:[#allocation5 + $0x328] sm:$0xff]
    %v156 = vld [vmem:[#allocation5 + $0x330] sm:$0xff]
    %v157 = vld [vmem:[#allocation5 + $0x338] sm:$0xff]
    %v158 = vld [vmem:[#allocation5 + $0x340] sm:$0xff]
    %v159 = vld [vmem:[#allocation5 + $0x348] sm:$0xff]
    %v160 = vld [vmem:[#allocation5 + $0x350] sm:$0xff]
    %v161 = vld [vmem:[#allocation5 + $0x358] sm:$0xff]
    %v162 = vld [vmem:[#allocation5 + $0x360] sm:$0xff]
    %v163 = vld [vmem:[#allocation5 + $0x368] sm:$0xff]
    %v164 = vld [vmem:[#allocation5 + $0x370] sm:$0xff]
    %v165 = vld [vmem:[#allocation5 + $0x378] sm:$0xff]
    %v166 = vld [vmem:[#allocation5 + $0x380] sm:$0xff]
    %v167 = vld [vmem:[#allocation5 + $0x388] sm:$0xff]
    %v168 = vld [vmem:[#allocation5 + $0x390] sm:$0xff]
    %v169 = vld [vmem:[#allocation5 + $0x398] sm:$0xff]
    %v170 = vld [vmem:[#allocation5 + $0x3a0] sm:$0xff]
    %v171 = vld [vmem:[#allocation5 + $0x3a8] sm:$0xff]
    %v172 = vld [vmem:[#allocation5 + $0x3b0] sm:$0xff]
    %v173 = vld [vmem:[#allocation5 + $0x3b8] sm:$0xff]
    %v174 = vld [vmem:[#allocation5 + $0x3c0] sm:$0xff]
    %v175 = vld [vmem:[#allocation5 + $0x3c8] sm:$0xff]
    %v176 = vld [vmem:[#allocation5 + $0x3d0] sm:$0xff]
    %v177 = vld [vmem:[#allocation5 + $0x3d8] sm:$0xff]
    %v178 = vld [vmem:[#allocation5 + $0x3e0] sm:$0xff]
    %v179 = vld [vmem:[#allocation5 + $0x3e8] sm:$0xff]
    %v180 = vld [vmem:[#allocation5 + $0x3f0] sm:$0xff]
    %v181 = vld [vmem:[#allocation5 + $0x3f8] sm:$0xff]
    %v182 = vld [vmem:[#allocation7] sm:$0xff]
    %v183 = vld [vmem:[#allocation7 + $0x8] sm:$0xff]
    %v186 = vlaneseq
    %v187 = vshrl.u32 %v186, 7
    %v188 = vsub.s32 0, %v187
    %v189 = vrot.slane %v182, %v188
    %v190 = vlaneseq
    %v191 = vshrl.u32 %v190, 7
    %v192 = vsub.s32 1, %v191
    %v193 = vrot.slane %v182, %v192
    %v194 = vlaneseq
    %v195 = vshrl.u32 %v194, 7
    %v196 = vsub.s32 2, %v195
    %v197 = vrot.slane %v182, %v196
    %v198 = vlaneseq
    %v199 = vshrl.u32 %v198, 7
    %v200 = vsub.s32 3, %v199
    %v201 = vrot.slane %v182, %v200
    %v202 = vlaneseq
    %v203 = vshrl.u32 %v202, 7
    %v204 = vsub.s32 4, %v203
    %v205 = vrot.slane %v182, %v204
    %v206 = vlaneseq
    %v207 = vshrl.u32 %v206, 7
    %v208 = vsub.s32 5, %v207
    %v209 = vrot.slane %v182, %v208
    %v210 = vlaneseq
    %v211 = vshrl.u32 %v210, 7
    %v212 = vsub.s32 6, %v211
    %v213 = vrot.slane %v182, %v212
    %v214 = vlaneseq
    %v215 = vshrl.u32 %v214, 7
    %v216 = vsub.s32 7, %v215
    %v217 = vrot.slane %v182, %v216
    %v218 = vlaneseq
    %v219 = vshrl.u32 %v218, 7
    %v220 = vsub.s32 0, %v219
    %v221 = vrot.slane %v183, %v220
    %v222 = vlaneseq
    %v223 = vshrl.u32 %v222, 7
    %v224 = vsub.s32 1, %v223
    %v225 = vrot.slane %v183, %v224
    %v226 = vlaneseq
    %v227 = vshrl.u32 %v226, 7
    %v228 = vsub.s32 2, %v227
    %v229 = vrot.slane %v183, %v228
    %v230 = vlaneseq
    %v231 = vshrl.u32 %v230, 7
    %v232 = vsub.s32 3, %v231
    %v233 = vrot.slane %v183, %v232
    %v234 = vlaneseq
    %v235 = vshrl.u32 %v234, 7
    %v236 = vsub.s32 4, %v235
    %v237 = vrot.slane %v183, %v236
    %v238 = vlaneseq
    %v239 = vshrl.u32 %v238, 7
    %v240 = vsub.s32 5, %v239
    %v241 = vrot.slane %v183, %v240
    %v242 = vlaneseq
    %v243 = vshrl.u32 %v242, 7
    %v244 = vsub.s32 6, %v243
    %v245 = vrot.slane %v183, %v244
    %v246 = vlaneseq
    %v247 = vshrl.u32 %v246, 7
    %v248 = vsub.s32 7, %v247
    %v249 = vrot.slane %v183, %v248
    %v394 = vunpack.c.l.b16 %v54
    %v395 = vunpack.c.h.b16 %v54
    %v396 = vunpack.c.l.b16 %v55
    %v397 = vunpack.c.h.b16 %v55
    %v398 = vunpack.c.l.b16 %v56
    %v399 = vunpack.c.h.b16 %v56
    %v400 = vunpack.c.l.b16 %v57
    %v401 = vunpack.c.h.b16 %v57
    %v402 = vunpack.c.l.b16 %v58
    %v403 = vunpack.c.h.b16 %v58
    %v404 = vunpack.c.l.b16 %v59
    %v405 = vunpack.c.h.b16 %v59
    %v406 = vunpack.c.l.b16 %v60
    %v407 = vunpack.c.h.b16 %v60
    %v408 = vunpack.c.l.b16 %v61
    %v409 = vunpack.c.h.b16 %v61
    %v410 = vunpack.c.l.b16 %v62
    %v411 = vunpack.c.h.b16 %v62
    %v412 = vunpack.c.l.b16 %v63
    %v413 = vunpack.c.h.b16 %v63
    %v414 = vunpack.c.l.b16 %v64
    %v415 = vunpack.c.h.b16 %v64
    %v416 = vunpack.c.l.b16 %v65
    %v417 = vunpack.c.h.b16 %v65
    %v418 = vunpack.c.l.b16 %v66
    %v419 = vunpack.c.h.b16 %v66
    %v420 = vunpack.c.l.b16 %v67
    %v421 = vunpack.c.h.b16 %v67
    %v422 = vunpack.c.l.b16 %v68
    %v423 = vunpack.c.h.b16 %v68
    %v424 = vunpack.c.l.b16 %v69
    %v425 = vunpack.c.h.b16 %v69
    %v426 = vunpack.c.l.b16 %v70
    %v427 = vunpack.c.h.b16 %v70
    %v428 = vunpack.c.l.b16 %v71
    %v429 = vunpack.c.h.b16 %v71
    %v430 = vunpack.c.l.b16 %v72
    %v431 = vunpack.c.h.b16 %v72
    %v432 = vunpack.c.l.b16 %v73
    %v433 = vunpack.c.h.b16 %v73
    %v434 = vunpack.c.l.b16 %v74
    %v435 = vunpack.c.h.b16 %v74
    %v436 = vunpack.c.l.b16 %v75
    %v437 = vunpack.c.h.b16 %v75
    %v438 = vunpack.c.l.b16 %v76
    %v439 = vunpack.c.h.b16 %v76
    %v440 = vunpack.c.l.b16 %v77
    %v441 = vunpack.c.h.b16 %v77
    %v442 = vunpack.c.l.b16 %v78
    %v443 = vunpack.c.h.b16 %v78
    %v444 = vunpack.c.l.b16 %v79
    %v445 = vunpack.c.h.b16 %v79
    %v446 = vunpack.c.l.b16 %v80
    %v447 = vunpack.c.h.b16 %v80
    %v448 = vunpack.c.l.b16 %v81
    %v449 = vunpack.c.h.b16 %v81
    %v450 = vunpack.c.l.b16 %v82
    %v451 = vunpack.c.h.b16 %v82
    %v452 = vunpack.c.l.b16 %v83
    %v453 = vunpack.c.h.b16 %v83
    %v454 = vunpack.c.l.b16 %v84
    %v455 = vunpack.c.h.b16 %v84
    %v456 = vunpack.c.l.b16 %v85
    %v457 = vunpack.c.h.b16 %v85
    %v458 = vunpack.c.l.b16 %v86
    %v459 = vunpack.c.h.b16 %v86
    %v460 = vunpack.c.l.b16 %v87
    %v461 = vunpack.c.h.b16 %v87
    %v462 = vunpack.c.l.b16 %v88
    %v463 = vunpack.c.h.b16 %v88
    %v464 = vunpack.c.l.b16 %v89
    %v465 = vunpack.c.h.b16 %v89
    %v466 = vunpack.c.l.b16 %v90
    %v467 = vunpack.c.h.b16 %v90
    %v468 = vunpack.c.l.b16 %v91
    %v469 = vunpack.c.h.b16 %v91
    %v470 = vunpack.c.l.b16 %v92
    %v471 = vunpack.c.h.b16 %v92
    %v472 = vunpack.c.l.b16 %v93
    %v473 = vunpack.c.h.b16 %v93
    %v474 = vunpack.c.l.b16 %v94
    %v475 = vunpack.c.h.b16 %v94
    %v476 = vunpack.c.l.b16 %v95
    %v477 = vunpack.c.h.b16 %v95
    %v478 = vunpack.c.l.b16 %v96
    %v479 = vunpack.c.h.b16 %v96
    %v480 = vunpack.c.l.b16 %v97
    %v481 = vunpack.c.h.b16 %v97
    %v482 = vunpack.c.l.b16 %v98
    %v483 = vunpack.c.h.b16 %v98
    %v484 = vunpack.c.l.b16 %v99
    %v485 = vunpack.c.h.b16 %v99
    %v486 = vunpack.c.l.b16 %v100
    %v487 = vunpack.c.h.b16 %v100
    %v488 = vunpack.c.l.b16 %v101
    %v489 = vunpack.c.h.b16 %v101
    %v490 = vunpack.c.l.b16 %v102
    %v491 = vunpack.c.h.b16 %v102
    %v492 = vunpack.c.l.b16 %v103
    %v493 = vunpack.c.h.b16 %v103
    %v494 = vunpack.c.l.b16 %v104
    %v495 = vunpack.c.h.b16 %v104
    %v496 = vunpack.c.l.b16 %v105
    %v497 = vunpack.c.h.b16 %v105
    %v498 = vunpack.c.l.b16 %v106
    %v499 = vunpack.c.h.b16 %v106
    %v500 = vunpack.c.l.b16 %v107
    %v501 = vunpack.c.h.b16 %v107
    %v502 = vunpack.c.l.b16 %v108
    %v503 = vunpack.c.h.b16 %v108
    %v504 = vunpack.c.l.b16 %v109
    %v505 = vunpack.c.h.b16 %v109
    %v506 = vunpack.c.l.b16 %v110
    %v507 = vunpack.c.h.b16 %v110
    %v508 = vunpack.c.l.b16 %v111
    %v509 = vunpack.c.h.b16 %v111
    %v510 = vunpack.c.l.b16 %v112
    %v511 = vunpack.c.h.b16 %v112
    %v512 = vunpack.c.l.b16 %v113
    %v513 = vunpack.c.h.b16 %v113
    %v514 = vunpack.c.l.b16 %v114
    %v515 = vunpack.c.h.b16 %v114
    %v516 = vunpack.c.l.b16 %v115
    %v517 = vunpack.c.h.b16 %v115
    %v518 = vunpack.c.l.b16 %v116
    %v519 = vunpack.c.h.b16 %v116
    %v520 = vunpack.c.l.b16 %v117
    %v521 = vunpack.c.h.b16 %v117
    %v522 = vunpack.c.l.b16 %v118
    %v523 = vunpack.c.h.b16 %v118
    %v524 = vunpack.c.l.b16 %v119
    %v525 = vunpack.c.h.b16 %v119
    %v526 = vunpack.c.l.b16 %v120
    %v527 = vunpack.c.h.b16 %v120
    %v528 = vunpack.c.l.b16 %v121
    %v529 = vunpack.c.h.b16 %v121
    %v530 = vunpack.c.l.b16 %v122
    %v531 = vunpack.c.h.b16 %v122
    %v532 = vunpack.c.l.b16 %v123
    %v533 = vunpack.c.h.b16 %v123
    %v534 = vunpack.c.l.b16 %v124
    %v535 = vunpack.c.h.b16 %v124
    %v536 = vunpack.c.l.b16 %v125
    %v537 = vunpack.c.h.b16 %v125
    %v538 = vunpack.c.l.b16 %v126
    %v539 = vunpack.c.h.b16 %v126
    %v540 = vunpack.c.l.b16 %v127
    %v541 = vunpack.c.h.b16 %v127
    %v542 = vunpack.c.l.b16 %v128
    %v543 = vunpack.c.h.b16 %v128
    %v544 = vunpack.c.l.b16 %v129
    %v545 = vunpack.c.h.b16 %v129
    %v546 = vunpack.c.l.b16 %v130
    %v547 = vunpack.c.h.b16 %v130
    %v548 = vunpack.c.l.b16 %v131
    %v549 = vunpack.c.h.b16 %v131
    %v550 = vunpack.c.l.b16 %v132
    %v551 = vunpack.c.h.b16 %v132
    %v552 = vunpack.c.l.b16 %v133
    %v553 = vunpack.c.h.b16 %v133
    %v554 = vunpack.c.l.b16 %v134
    %v555 = vunpack.c.h.b16 %v134
    %v556 = vunpack.c.l.b16 %v135
    %v557 = vunpack.c.h.b16 %v135
    %v558 = vunpack.c.l.b16 %v136
    %v559 = vunpack.c.h.b16 %v136
    %v560 = vunpack.c.l.b16 %v137
    %v561 = vunpack.c.h.b16 %v137
    %v562 = vunpack.c.l.b16 %v138
    %v563 = vunpack.c.h.b16 %v138
    %v564 = vunpack.c.l.b16 %v139
    %v565 = vunpack.c.h.b16 %v139
    %v566 = vunpack.c.l.b16 %v140
    %v567 = vunpack.c.h.b16 %v140
    %v568 = vunpack.c.l.b16 %v141
    %v569 = vunpack.c.h.b16 %v141
    %v570 = vunpack.c.l.b16 %v142
    %v571 = vunpack.c.h.b16 %v142
    %v572 = vunpack.c.l.b16 %v143
    %v573 = vunpack.c.h.b16 %v143
    %v574 = vunpack.c.l.b16 %v144
    %v575 = vunpack.c.h.b16 %v144
    %v576 = vunpack.c.l.b16 %v145
    %v577 = vunpack.c.h.b16 %v145
    %v578 = vunpack.c.l.b16 %v146
    %v579 = vunpack.c.h.b16 %v146
    %v580 = vunpack.c.l.b16 %v147
    %v581 = vunpack.c.h.b16 %v147
    %v582 = vunpack.c.l.b16 %v148
    %v583 = vunpack.c.h.b16 %v148
    %v584 = vunpack.c.l.b16 %v149
    %v585 = vunpack.c.h.b16 %v149
    %v586 = vunpack.c.l.b16 %v150
    %v587 = vunpack.c.h.b16 %v150
    %v588 = vunpack.c.l.b16 %v151
    %v589 = vunpack.c.h.b16 %v151
    %v590 = vunpack.c.l.b16 %v152
    %v591 = vunpack.c.h.b16 %v152
    %v592 = vunpack.c.l.b16 %v153
    %v593 = vunpack.c.h.b16 %v153
    %v594 = vunpack.c.l.b16 %v154
    %v595 = vunpack.c.h.b16 %v154
    %v596 = vunpack.c.l.b16 %v155
    %v597 = vunpack.c.h.b16 %v155
    %v598 = vunpack.c.l.b16 %v156
    %v599 = vunpack.c.h.b16 %v156
    %v600 = vunpack.c.l.b16 %v157
    %v601 = vunpack.c.h.b16 %v157
    %v602 = vunpack.c.l.b16 %v158
    %v603 = vunpack.c.h.b16 %v158
    %v604 = vunpack.c.l.b16 %v159
    %v605 = vunpack.c.h.b16 %v159
    %v606 = vunpack.c.l.b16 %v160
    %v607 = vunpack.c.h.b16 %v160
    %v608 = vunpack.c.l.b16 %v161
    %v609 = vunpack.c.h.b16 %v161
    %v610 = vunpack.c.l.b16 %v162
    %v611 = vunpack.c.h.b16 %v162
    %v612 = vunpack.c.l.b16 %v163
    %v613 = vunpack.c.h.b16 %v163
    %v614 = vunpack.c.l.b16 %v164
    %v615 = vunpack.c.h.b16 %v164
    %v616 = vunpack.c.l.b16 %v165
    %v617 = vunpack.c.h.b16 %v165
    %v618 = vunpack.c.l.b16 %v166
    %v619 = vunpack.c.h.b16 %v166
    %v620 = vunpack.c.l.b16 %v167
    %v621 = vunpack.c.h.b16 %v167
    %v622 = vunpack.c.l.b16 %v168
    %v623 = vunpack.c.h.b16 %v168
    %v624 = vunpack.c.l.b16 %v169
    %v625 = vunpack.c.h.b16 %v169
    %v626 = vunpack.c.l.b16 %v170
    %v627 = vunpack.c.h.b16 %v170
    %v628 = vunpack.c.l.b16 %v171
    %v629 = vunpack.c.h.b16 %v171
    %v630 = vunpack.c.l.b16 %v172
    %v631 = vunpack.c.h.b16 %v172
    %v632 = vunpack.c.l.b16 %v173
    %v633 = vunpack.c.h.b16 %v173
    %v634 = vunpack.c.l.b16 %v174
    %v635 = vunpack.c.h.b16 %v174
    %v636 = vunpack.c.l.b16 %v175
    %v637 = vunpack.c.h.b16 %v175
    %v638 = vunpack.c.l.b16 %v176
    %v639 = vunpack.c.h.b16 %v176
    %v640 = vunpack.c.l.b16 %v177
    %v641 = vunpack.c.h.b16 %v177
    %v642 = vunpack.c.l.b16 %v178
    %v643 = vunpack.c.h.b16 %v178
    %v644 = vunpack.c.l.b16 %v179
    %v645 = vunpack.c.h.b16 %v179
    %v646 = vunpack.c.l.b16 %v180
    %v647 = vunpack.c.h.b16 %v180
    %v648 = vunpack.c.l.b16 %v181
    %v649 = vunpack.c.h.b16 %v181
    %v650 = vpack.c.b16 %v410, %v394
    %v651 = vpack.c.b16 %v411, %v395
    %v652 = vpack.c.b16 %v412, %v396
    %v653 = vpack.c.b16 %v413, %v397
    %v654 = vpack.c.b16 %v414, %v398
    %v655 = vpack.c.b16 %v415, %v399
    %v656 = vpack.c.b16 %v416, %v400
    %v657 = vpack.c.b16 %v417, %v401
    %v658 = vpack.c.b16 %v418, %v402
    %v659 = vpack.c.b16 %v419, %v403
    %v660 = vpack.c.b16 %v420, %v404
    %v661 = vpack.c.b16 %v421, %v405
    %v662 = vpack.c.b16 %v422, %v406
    %v663 = vpack.c.b16 %v423, %v407
    %v664 = vpack.c.b16 %v424, %v408
    %v665 = vpack.c.b16 %v425, %v409
    %v666 = vpack.c.b16 %v442, %v426
    %v667 = vpack.c.b16 %v443, %v427
    %v668 = vpack.c.b16 %v444, %v428
    %v669 = vpack.c.b16 %v445, %v429
    %v670 = vpack.c.b16 %v446, %v430
    %v671 = vpack.c.b16 %v447, %v431
    %v672 = vpack.c.b16 %v448, %v432
    %v673 = vpack.c.b16 %v449, %v433
    %v674 = vpack.c.b16 %v450, %v434
    %v675 = vpack.c.b16 %v451, %v435
    %v676 = vpack.c.b16 %v452, %v436
    %v677 = vpack.c.b16 %v453, %v437
    %v678 = vpack.c.b16 %v454, %v438
    %v679 = vpack.c.b16 %v455, %v439
    %v680 = vpack.c.b16 %v456, %v440
    %v681 = vpack.c.b16 %v457, %v441
    %v682 = vpack.c.b16 %v474, %v458
    %v683 = vpack.c.b16 %v475, %v459
    %v684 = vpack.c.b16 %v476, %v460
    %v685 = vpack.c.b16 %v477, %v461
    %v686 = vpack.c.b16 %v478, %v462
    %v687 = vpack.c.b16 %v479, %v463
    %v688 = vpack.c.b16 %v480, %v464
    %v689 = vpack.c.b16 %v481, %v465
    %v690 = vpack.c.b16 %v482, %v466
    %v691 = vpack.c.b16 %v483, %v467
    %v692 = vpack.c.b16 %v484, %v468
    %v693 = vpack.c.b16 %v485, %v469
    %v694 = vpack.c.b16 %v486, %v470
    %v695 = vpack.c.b16 %v487, %v471
    %v696 = vpack.c.b16 %v488, %v472
    %v697 = vpack.c.b16 %v489, %v473
    %v698 = vpack.c.b16 %v506, %v490
    %v699 = vpack.c.b16 %v507, %v491
    %v700 = vpack.c.b16 %v508, %v492
    %v701 = vpack.c.b16 %v509, %v493
    %v702 = vpack.c.b16 %v510, %v494
    %v703 = vpack.c.b16 %v511, %v495
    %v704 = vpack.c.b16 %v512, %v496
    %v705 = vpack.c.b16 %v513, %v497
    %v706 = vpack.c.b16 %v514, %v498
    %v707 = vpack.c.b16 %v515, %v499
    %v708 = vpack.c.b16 %v516, %v500
    %v709 = vpack.c.b16 %v517, %v501
    %v710 = vpack.c.b16 %v518, %v502
    %v711 = vpack.c.b16 %v519, %v503
    %v712 = vpack.c.b16 %v520, %v504
    %v713 = vpack.c.b16 %v521, %v505
    %v714 = vpack.c.b16 %v538, %v522
    %v715 = vpack.c.b16 %v539, %v523
    %v716 = vpack.c.b16 %v540, %v524
    %v717 = vpack.c.b16 %v541, %v525
    %v718 = vpack.c.b16 %v542, %v526
    %v719 = vpack.c.b16 %v543, %v527
    %v720 = vpack.c.b16 %v544, %v528
    %v721 = vpack.c.b16 %v545, %v529
    %v722 = vpack.c.b16 %v546, %v530
    %v723 = vpack.c.b16 %v547, %v531
    %v724 = vpack.c.b16 %v548, %v532
    %v725 = vpack.c.b16 %v549, %v533
    %v726 = vpack.c.b16 %v550, %v534
    %v727 = vpack.c.b16 %v551, %v535
    %v728 = vpack.c.b16 %v552, %v536
    %v729 = vpack.c.b16 %v553, %v537
    %v730 = vpack.c.b16 %v570, %v554
    %v731 = vpack.c.b16 %v571, %v555
    %v732 = vpack.c.b16 %v572, %v556
    %v733 = vpack.c.b16 %v573, %v557
    %v734 = vpack.c.b16 %v574, %v558
    %v735 = vpack.c.b16 %v575, %v559
    %v736 = vpack.c.b16 %v576, %v560
    %v737 = vpack.c.b16 %v577, %v561
    %v738 = vpack.c.b16 %v578, %v562
    %v739 = vpack.c.b16 %v579, %v563
    %v740 = vpack.c.b16 %v580, %v564
    %v741 = vpack.c.b16 %v581, %v565
    %v742 = vpack.c.b16 %v582, %v566
    %v743 = vpack.c.b16 %v583, %v567
    %v744 = vpack.c.b16 %v584, %v568
    %v745 = vpack.c.b16 %v585, %v569
    %v746 = vpack.c.b16 %v602, %v586
    %v747 = vpack.c.b16 %v603, %v587
    %v748 = vpack.c.b16 %v604, %v588
    %v749 = vpack.c.b16 %v605, %v589
    %v750 = vpack.c.b16 %v606, %v590
    %v751 = vpack.c.b16 %v607, %v591
    %v752 = vpack.c.b16 %v608, %v592
    %v753 = vpack.c.b16 %v609, %v593
    %v754 = vpack.c.b16 %v610, %v594
    %v755 = vpack.c.b16 %v611, %v595
    %v756 = vpack.c.b16 %v612, %v596
    %v757 = vpack.c.b16 %v613, %v597
    %v758 = vpack.c.b16 %v614, %v598
    %v759 = vpack.c.b16 %v615, %v599
    %v760 = vpack.c.b16 %v616, %v600
    %v761 = vpack.c.b16 %v617, %v601
    %v762 = vpack.c.b16 %v634, %v618
    %v763 = vpack.c.b16 %v635, %v619
    %v764 = vpack.c.b16 %v636, %v620
    %v765 = vpack.c.b16 %v637, %v621
    %v766 = vpack.c.b16 %v638, %v622
    %v767 = vpack.c.b16 %v639, %v623
    %v768 = vpack.c.b16 %v640, %v624
    %v769 = vpack.c.b16 %v641, %v625
    %v770 = vpack.c.b16 %v642, %v626
    %v771 = vpack.c.b16 %v643, %v627
    %v772 = vpack.c.b16 %v644, %v628
    %v773 = vpack.c.b16 %v645, %v629
    %v774 = vpack.c.b16 %v646, %v630
    %v775 = vpack.c.b16 %v647, %v631
    %v776 = vpack.c.b16 %v648, %v632
    %v777 = vpack.c.b16 %v649, %v633
    %906 = vmatprep.subr.bf16.mxu0 %v763
    %907 = vmatpush1.bf16.msra.mxu0 %v762
    %908 = vmatprep.subr.bf16.mxu0 %v747
    %909 = vmatpush1.bf16.msra.mxu0 %v746
    %910 = vmatprep.subr.bf16.mxu0 %v731
    %911 = vmatpush1.bf16.msra.mxu0 %v730
    %912 = vmatprep.subr.bf16.mxu0 %v715
    %913 = vmatpush1.bf16.msra.mxu0 %v714
    %914 = vmatprep.subr.bf16.mxu0 %v699
    %915 = vmatpush1.bf16.msra.mxu0 %v698
    %916 = vmatprep.subr.bf16.mxu0 %v683
    %917 = vmatpush1.bf16.msra.mxu0 %v682
    %918 = vmatprep.subr.bf16.mxu0 %v667
    %919 = vmatpush1.bf16.msra.mxu0 %v666
    %920 = vmatprep.subr.bf16.mxu0 %v651
    %921 = vmatpush1.bf16.msra.mxu0 %v650
    %922 = vmatprep.subr.bf16.mxu0 0
    %923 = vmatpush2.bf16.msra.mxu0 0
    %924 = vmatprep.subr.bf16.mxu0 0
    %925 = vmatpush2.bf16.msra.mxu0 0
    %926 = vmatprep.subr.bf16.mxu0 0
    %927 = vmatpush2.bf16.msra.mxu0 0
    %928 = vmatprep.subr.bf16.mxu0 0
    %929 = vmatpush2.bf16.msra.mxu0 0
    %930 = vmatprep.subr.bf16.mxu0 0
    %931 = vmatpush2.bf16.msra.mxu0 0
    %932 = vmatprep.subr.bf16.mxu0 0
    %933 = vmatpush2.bf16.msra.mxu0 0
    %934 = vmatprep.subr.bf16.mxu0 0
    %935 = vmatpush2.bf16.msra.mxu0 0
    %936 = vmatprep.subr.bf16.mxu0 0
    %937 = vmatpush2.bf16.msra.mxu0 0
    %938 = vmatprep.mubr.bf16.mxu0 0
    %939 = vmatmul.mubr.bf16.gmra.mxu0 %v53
    %v940 = vpop.f32.mrf.mxu0
    %v941 = vadd.f32 %v189, %v940
    %v942 = vpop.f32.mrf.mxu0
    %v943 = vadd.f32 %v193, %v942
    %v944 = vpop.f32.mrf.mxu0
    %v945 = vpop.f32.mrf.mxu0
    %946 = vdwg.mxu0
    %947 = vmatprep.subr.bf16.mxu0 %v765
    %948 = vmatpush1.bf16.msra.mxu0 %v764
    %949 = vmatprep.subr.bf16.mxu0 %v749
    %950 = vmatpush1.bf16.msra.mxu0 %v748
    %951 = vmatprep.subr.bf16.mxu0 %v733
    %952 = vmatpush1.bf16.msra.mxu0 %v732
    %953 = vmatprep.subr.bf16.mxu0 %v717
    %954 = vmatpush1.bf16.msra.mxu0 %v716
    %955 = vmatprep.subr.bf16.mxu0 %v701
    %956 = vmatpush1.bf16.msra.mxu0 %v700
    %957 = vmatprep.subr.bf16.mxu0 %v685
    %958 = vmatpush1.bf16.msra.mxu0 %v684
    %959 = vmatprep.subr.bf16.mxu0 %v669
    %960 = vmatpush1.bf16.msra.mxu0 %v668
    %961 = vmatprep.subr.bf16.mxu0 %v653
    %962 = vmatpush1.bf16.msra.mxu0 %v652
    %963 = vmatprep.subr.bf16.mxu0 0
    %964 = vmatpush2.bf16.msra.mxu0 0
    %965 = vmatprep.subr.bf16.mxu0 0
    %966 = vmatpush2.bf16.msra.mxu0 0
    %967 = vmatprep.subr.bf16.mxu0 0
    %968 = vmatpush2.bf16.msra.mxu0 0
    %969 = vmatprep.subr.bf16.mxu0 0
    %970 = vmatpush2.bf16.msra.mxu0 0
    %971 = vmatprep.subr.bf16.mxu0 0
    %972 = vmatpush2.bf16.msra.mxu0 0
    %973 = vmatprep.subr.bf16.mxu0 0
    %974 = vmatpush2.bf16.msra.mxu0 0
    %975 = vmatprep.subr.bf16.mxu0 0
    %976 = vmatpush2.bf16.msra.mxu0 0
    %977 = vmatprep.subr.bf16.mxu0 0
    %978 = vmatpush2.bf16.msra.mxu0 0
    %979 = vmatprep.mubr.bf16.mxu0 0
    %980 = vmatmul.mubr.bf16.gmra.mxu0 %v53
    %v981 = vpop.f32.mrf.mxu0
    %v982 = vadd.f32 %v197, %v981
    %v983 = vpop.f32.mrf.mxu0
    %v984 = vadd.f32 %v201, %v983
    %v985 = vpop.f32.mrf.mxu0
    %v986 = vpop.f32.mrf.mxu0
    %987 = vdwg.mxu0
    %988 = vmatprep.subr.bf16.mxu0 %v767
    %989 = vmatpush1.bf16.msra.mxu0 %v766
    %990 = vmatprep.subr.bf16.mxu0 %v751
    %991 = vmatpush1.bf16.msra.mxu0 %v750
    %992 = vmatprep.subr.bf16.mxu0 %v735
    %993 = vmatpush1.bf16.msra.mxu0 %v734
    %994 = vmatprep.subr.bf16.mxu0 %v719
    %995 = vmatpush1.bf16.msra.mxu0 %v718
    %996 = vmatprep.subr.bf16.mxu0 %v703
    %997 = vmatpush1.bf16.msra.mxu0 %v702
    %998 = vmatprep.subr.bf16.mxu0 %v687
    %999 = vmatpush1.bf16.msra.mxu0 %v686
    %1000 = vmatprep.subr.bf16.mxu0 %v671
    %1001 = vmatpush1.bf16.msra.mxu0 %v670
    %1002 = vmatprep.subr.bf16.mxu0 %v655
    %1003 = vmatpush1.bf16.msra.mxu0 %v654
    %1004 = vmatprep.subr.bf16.mxu0 0
    %1005 = vmatpush2.bf16.msra.mxu0 0
    %1006 = vmatprep.subr.bf16.mxu0 0
    %1007 = vmatpush2.bf16.msra.mxu0 0
    %1008 = vmatprep.subr.bf16.mxu0 0
    %1009 = vmatpush2.bf16.msra.mxu0 0
    %1010 = vmatprep.subr.bf16.mxu0 0
    %1011 = vmatpush2.bf16.msra.mxu0 0
    %1012 = vmatprep.subr.bf16.mxu0 0
    %1013 = vmatpush2.bf16.msra.mxu0 0
    %1014 = vmatprep.subr.bf16.mxu0 0
    %1015 = vmatpush2.bf16.msra.mxu0 0
    %1016 = vmatprep.subr.bf16.mxu0 0
    %1017 = vmatpush2.bf16.msra.mxu0 0
    %1018 = vmatprep.subr.bf16.mxu0 0
    %1019 = vmatpush2.bf16.msra.mxu0 0
    %1020 = vmatprep.mubr.bf16.mxu0 0
    %1021 = vmatmul.mubr.bf16.gmra.mxu0 %v53
    %v1022 = vpop.f32.mrf.mxu0
    %v1023 = vadd.f32 %v205, %v1022
    %v1024 = vpop.f32.mrf.mxu0
    %v1025 = vadd.f32 %v209, %v1024
    %v1026 = vpop.f32.mrf.mxu0
    %v1027 = vpop.f32.mrf.mxu0
    %1028 = vdwg.mxu0
    %1029 = vmatprep.subr.bf16.mxu0 %v769
    %1030 = vmatpush1.bf16.msra.mxu0 %v768
    %1031 = vmatprep.subr.bf16.mxu0 %v753
    %1032 = vmatpush1.bf16.msra.mxu0 %v752
    %1033 = vmatprep.subr.bf16.mxu0 %v737
    %1034 = vmatpush1.bf16.msra.mxu0 %v736
    %1035 = vmatprep.subr.bf16.mxu0 %v721
    %1036 = vmatpush1.bf16.msra.mxu0 %v720
    %1037 = vmatprep.subr.bf16.mxu0 %v705
    %1038 = vmatpush1.bf16.msra.mxu0 %v704
    %1039 = vmatprep.subr.bf16.mxu0 %v689
    %1040 = vmatpush1.bf16.msra.mxu0 %v688
    %1041 = vmatprep.subr.bf16.mxu0 %v673
    %1042 = vmatpush1.bf16.msra.mxu0 %v672
    %1043 = vmatprep.subr.bf16.mxu0 %v657
    %1044 = vmatpush1.bf16.msra.mxu0 %v656
    %1045 = vmatprep.subr.bf16.mxu0 0
    %1046 = vmatpush2.bf16.msra.mxu0 0
    %1047 = vmatprep.subr.bf16.mxu0 0
    %1048 = vmatpush2.bf16.msra.mxu0 0
    %1049 = vmatprep.subr.bf16.mxu0 0
    %1050 = vmatpush2.bf16.msra.mxu0 0
    %1051 = vmatprep.subr.bf16.mxu0 0
    %1052 = vmatpush2.bf16.msra.mxu0 0
    %1053 = vmatprep.subr.bf16.mxu0 0
    %1054 = vmatpush2.bf16.msra.mxu0 0
    %1055 = vmatprep.subr.bf16.mxu0 0
    %1056 = vmatpush2.bf16.msra.mxu0 0
    %1057 = vmatprep.subr.bf16.mxu0 0
    %1058 = vmatpush2.bf16.msra.mxu0 0
    %1059 = vmatprep.subr.bf16.mxu0 0
    %1060 = vmatpush2.bf16.msra.mxu0 0
    %1061 = vmatprep.mubr.bf16.mxu0 0
    %1062 = vmatmul.mubr.bf16.gmra.mxu0 %v53
    %v1063 = vpop.f32.mrf.mxu0
    %v1064 = vadd.f32 %v213, %v1063
    %v1065 = vpop.f32.mrf.mxu0
    %v1066 = vadd.f32 %v217, %v1065
    %v1067 = vpop.f32.mrf.mxu0
    %v1068 = vpop.f32.mrf.mxu0
    %1069 = vdwg.mxu0
    %1070 = vmatprep.subr.bf16.mxu0 %v771
    %1071 = vmatpush1.bf16.msra.mxu0 %v770
    %1072 = vmatprep.subr.bf16.mxu0 %v755
    %1073 = vmatpush1.bf16.msra.mxu0 %v754
    %1074 = vmatprep.subr.bf16.mxu0 %v739
    %1075 = vmatpush1.bf16.msra.mxu0 %v738
    %1076 = vmatprep.subr.bf16.mxu0 %v723
    %1077 = vmatpush1.bf16.msra.mxu0 %v722
    %1078 = vmatprep.subr.bf16.mxu0 %v707
    %1079 = vmatpush1.bf16.msra.mxu0 %v706
    %1080 = vmatprep.subr.bf16.mxu0 %v691
    %1081 = vmatpush1.bf16.msra.mxu0 %v690
    %1082 = vmatprep.subr.bf16.mxu0 %v675
    %1083 = vmatpush1.bf16.msra.mxu0 %v674
    %1084 = vmatprep.subr.bf16.mxu0 %v659
    %1085 = vmatpush1.bf16.msra.mxu0 %v658
    %1086 = vmatprep.subr.bf16.mxu0 0
    %1087 = vmatpush2.bf16.msra.mxu0 0
    %1088 = vmatprep.subr.bf16.mxu0 0
    %1089 = vmatpush2.bf16.msra.mxu0 0
    %1090 = vmatprep.subr.bf16.mxu0 0
    %1091 = vmatpush2.bf16.msra.mxu0 0
    %1092 = vmatprep.subr.bf16.mxu0 0
    %1093 = vmatpush2.bf16.msra.mxu0 0
    %1094 = vmatprep.subr.bf16.mxu0 0
    %1095 = vmatpush2.bf16.msra.mxu0 0
    %1096 = vmatprep.subr.bf16.mxu0 0
    %1097 = vmatpush2.bf16.msra.mxu0 0
    %1098 = vmatprep.subr.bf16.mxu0 0
    %1099 = vmatpush2.bf16.msra.mxu0 0
    %1100 = vmatprep.subr.bf16.mxu0 0
    %1101 = vmatpush2.bf16.msra.mxu0 0
    %1102 = vmatprep.mubr.bf16.mxu0 0
    %1103 = vmatmul.mubr.bf16.gmra.mxu0 %v53
    %v1104 = vpop.f32.mrf.mxu0
    %v1105 = vadd.f32 %v221, %v1104
    %v1106 = vpop.f32.mrf.mxu0
    %v1107 = vadd.f32 %v225, %v1106
    %v1108 = vpop.f32.mrf.mxu0
    %v1109 = vpop.f32.mrf.mxu0
    %1110 = vdwg.mxu0
    %1111 = vmatprep.subr.bf16.mxu0 %v773
    %1112 = vmatpush1.bf16.msra.mxu0 %v772
    %1113 = vmatprep.subr.bf16.mxu0 %v757
    %1114 = vmatpush1.bf16.msra.mxu0 %v756
    %1115 = vmatprep.subr.bf16.mxu0 %v741
    %1116 = vmatpush1.bf16.msra.mxu0 %v740
    %1117 = vmatprep.subr.bf16.mxu0 %v725
    %1118 = vmatpush1.bf16.msra.mxu0 %v724
    %1119 = vmatprep.subr.bf16.mxu0 %v709
    %1120 = vmatpush1.bf16.msra.mxu0 %v708
    %1121 = vmatprep.subr.bf16.mxu0 %v693
    %1122 = vmatpush1.bf16.msra.mxu0 %v692
    %1123 = vmatprep.subr.bf16.mxu0 %v677
    %1124 = vmatpush1.bf16.msra.mxu0 %v676
    %1125 = vmatprep.subr.bf16.mxu0 %v661
    %1126 = vmatpush1.bf16.msra.mxu0 %v660
    %1127 = vmatprep.subr.bf16.mxu0 0
    %1128 = vmatpush2.bf16.msra.mxu0 0
    %1129 = vmatprep.subr.bf16.mxu0 0
    %1130 = vmatpush2.bf16.msra.mxu0 0
    %1131 = vmatprep.subr.bf16.mxu0 0
    %1132 = vmatpush2.bf16.msra.mxu0 0
    %1133 = vmatprep.subr.bf16.mxu0 0
    %1134 = vmatpush2.bf16.msra.mxu0 0
    %1135 = vmatprep.subr.bf16.mxu0 0
    %1136 = vmatpush2.bf16.msra.mxu0 0
    %1137 = vmatprep.subr.bf16.mxu0 0
    %1138 = vmatpush2.bf16.msra.mxu0 0
    %1139 = vmatprep.subr.bf16.mxu0 0
    %1140 = vmatpush2.bf16.msra.mxu0 0
    %1141 = vmatprep.subr.bf16.mxu0 0
    %1142 = vmatpush2.bf16.msra.mxu0 0
    %1143 = vmatprep.mubr.bf16.mxu0 0
    %1144 = vmatmul.mubr.bf16.gmra.mxu0 %v53
    %v1145 = vpop.f32.mrf.mxu0
    %v1146 = vadd.f32 %v229, %v1145
    %v1147 = vpop.f32.mrf.mxu0
    %v1148 = vadd.f32 %v233, %v1147
    %v1149 = vpop.f32.mrf.mxu0
    %v1150 = vpop.f32.mrf.mxu0
    %1151 = vdwg.mxu0
    %1152 = vmatprep.subr.bf16.mxu0 %v775
    %1153 = vmatpush1.bf16.msra.mxu0 %v774
    %1154 = vmatprep.subr.bf16.mxu0 %v759
    %1155 = vmatpush1.bf16.msra.mxu0 %v758
    %1156 = vmatprep.subr.bf16.mxu0 %v743
    %1157 = vmatpush1.bf16.msra.mxu0 %v742
    %1158 = vmatprep.subr.bf16.mxu0 %v727
    %1159 = vmatpush1.bf16.msra.mxu0 %v726
    %1160 = vmatprep.subr.bf16.mxu0 %v711
    %1161 = vmatpush1.bf16.msra.mxu0 %v710
    %1162 = vmatprep.subr.bf16.mxu0 %v695
    %1163 = vmatpush1.bf16.msra.mxu0 %v694
    %1164 = vmatprep.subr.bf16.mxu0 %v679
    %1165 = vmatpush1.bf16.msra.mxu0 %v678
    %1166 = vmatprep.subr.bf16.mxu0 %v663
    %1167 = vmatpush1.bf16.msra.mxu0 %v662
    %1168 = vmatprep.subr.bf16.mxu0 0
    %1169 = vmatpush2.bf16.msra.mxu0 0
    %1170 = vmatprep.subr.bf16.mxu0 0
    %1171 = vmatpush2.bf16.msra.mxu0 0
    %1172 = vmatprep.subr.bf16.mxu0 0
    %1173 = vmatpush2.bf16.msra.mxu0 0
    %1174 = vmatprep.subr.bf16.mxu0 0
    %1175 = vmatpush2.bf16.msra.mxu0 0
    %1176 = vmatprep.subr.bf16.mxu0 0
    %1177 = vmatpush2.bf16.msra.mxu0 0
    %1178 = vmatprep.subr.bf16.mxu0 0
    %1179 = vmatpush2.bf16.msra.mxu0 0
    %1180 = vmatprep.subr.bf16.mxu0 0
    %1181 = vmatpush2.bf16.msra.mxu0 0
    %1182 = vmatprep.subr.bf16.mxu0 0
    %1183 = vmatpush2.bf16.msra.mxu0 0
    %1184 = vmatprep.mubr.bf16.mxu0 0
    %1185 = vmatmul.mubr.bf16.gmra.mxu0 %v53
    %v1186 = vpop.f32.mrf.mxu0
    %v1187 = vadd.f32 %v237, %v1186
    %v1188 = vpop.f32.mrf.mxu0
    %v1189 = vadd.f32 %v241, %v1188
    %v1190 = vpop.f32.mrf.mxu0
    %v1191 = vpop.f32.mrf.mxu0
    %1192 = vdwg.mxu0
    %1193 = vmatprep.subr.bf16.mxu0 %v777
    %1194 = vmatpush1.bf16.msra.mxu0 %v776
    %1195 = vmatprep.subr.bf16.mxu0 %v761
    %1196 = vmatpush1.bf16.msra.mxu0 %v760
    %1197 = vmatprep.subr.bf16.mxu0 %v745
    %1198 = vmatpush1.bf16.msra.mxu0 %v744
    %1199 = vmatprep.subr.bf16.mxu0 %v729
    %1200 = vmatpush1.bf16.msra.mxu0 %v728
    %1201 = vmatprep.subr.bf16.mxu0 %v713
    %1202 = vmatpush1.bf16.msra.mxu0 %v712
    %1203 = vmatprep.subr.bf16.mxu0 %v697
    %1204 = vmatpush1.bf16.msra.mxu0 %v696
    %1205 = vmatprep.subr.bf16.mxu0 %v681
    %1206 = vmatpush1.bf16.msra.mxu0 %v680
    %1207 = vmatprep.subr.bf16.mxu0 %v665
    %1208 = vmatpush1.bf16.msra.mxu0 %v664
    %1209 = vmatprep.subr.bf16.mxu0 0
    %1210 = vmatpush2.bf16.msra.mxu0 0
    %1211 = vmatprep.subr.bf16.mxu0 0
    %1212 = vmatpush2.bf16.msra.mxu0 0
    %1213 = vmatprep.subr.bf16.mxu0 0
    %1214 = vmatpush2.bf16.msra.mxu0 0
    %1215 = vmatprep.subr.bf16.mxu0 0
    %1216 = vmatpush2.bf16.msra.mxu0 0
    %1217 = vmatprep.subr.bf16.mxu0 0
    %1218 = vmatpush2.bf16.msra.mxu0 0
    %1219 = vmatprep.subr.bf16.mxu0 0
    %1220 = vmatpush2.bf16.msra.mxu0 0
    %1221 = vmatprep.subr.bf16.mxu0 0
    %1222 = vmatpush2.bf16.msra.mxu0 0
    %1223 = vmatprep.subr.bf16.mxu0 0
    %1224 = vmatpush2.bf16.msra.mxu0 0
    %1225 = vmatprep.mubr.bf16.mxu0 0
    %1226 = vmatmul.mubr.bf16.gmra.mxu0 %v53
    %v1227 = vpop.f32.mrf.mxu0
    %v1228 = vadd.f32 %v245, %v1227
    %v1229 = vpop.f32.mrf.mxu0
    %v1230 = vadd.f32 %v249, %v1229
    %v1231 = vpop.f32.mrf.mxu0
    %v1232 = vpop.f32.mrf.mxu0
    %1233 = vdwg.mxu0
    %1234 = vst [vmem:[#allocation8] sm:$0xff] %v941
    %1235 = vst [vmem:[#allocation8 + $0x8] sm:$0xff] %v943
    %1236 = vst [vmem:[#allocation8 + $0x10] sm:$0xff] %v982
    %1237 = vst [vmem:[#allocation8 + $0x18] sm:$0xff] %v984
    %1238 = vst [vmem:[#allocation8 + $0x20] sm:$0xff] %v1023
    %1239 = vst [vmem:[#allocation8 + $0x28] sm:$0xff] %v1025
    %1240 = vst [vmem:[#allocation8 + $0x30] sm:$0xff] %v1064
    %1241 = vst [vmem:[#allocation8 + $0x38] sm:$0xff] %v1066
    %1242 = vst [vmem:[#allocation8 + $0x40] sm:$0xff] %v1105
    %1243 = vst [vmem:[#allocation8 + $0x48] sm:$0xff] %v1107
    %1244 = vst [vmem:[#allocation8 + $0x50] sm:$0xff] %v1146
    %1245 = vst [vmem:[#allocation8 + $0x58] sm:$0xff] %v1148
    %1246 = vst [vmem:[#allocation8 + $0x60] sm:$0xff] %v1187
    %1247 = vst [vmem:[#allocation8 + $0x68] sm:$0xff] %v1189
    %1248 = vst [vmem:[#allocation8 + $0x70] sm:$0xff] %v1228
    %1249 = vst [vmem:[#allocation8 + $0x78] sm:$0xff] %v1230
    // Predicated region
    $region26: #{tpu_custom_call.1} parent=1 // pred_check
      _
    $region27: #{tpu_custom_call.1} parent=1 // pred_check_branch
      %1251 = sbr.rel (0) target = $region29
    $region28: #{tpu_custom_call.1} parent=1 // pred_region
      %s1253 = ssub.s32 2048, 2048
      %1254 = vsyncadd [#allocation4], %s1253
      %s1256 = sshll.u32 [#allocation8], 4
      %s1257 = int_to_ptr.vmem [resolvable:$true] %s1256
      %1259 = dma.vmem_to_hbm [thread:$0]  %s1257, 2048, %s3, [#allocation4]
    $region29: #{tpu_custom_call.1} parent=1 // pred_fallthru
      _
    // Predicated region
    $region30: #{tpu_custom_call.1} parent=1 // pred_check
      _
    $region31: #{tpu_custom_call.1} parent=1 // pred_check_branch
      %1261 = sbr.rel (0) target = $region33
    $region32: #{tpu_custom_call.1} parent=1 // pred_region
      %1262 = dma.done [#allocation4], 2048
    $region33: #{tpu_custom_call.1} parent=1 // pred_fallthru
      _
    %1263 = vsyncpa [#allocation3], 1
    %1264 = vsyncpa [#allocation6], 1
    %1265 = vsyncpa [#allocation4], 1

</llo_original>
